<compile_context>
chip_gen: v7x
topology: tpu7x:2x2x1
jax: 0.10.0
libtpu: 0.0.40
codegen_flags: <defaults>
</compile_context>

<pallas_src>
import functools

import jax
import jax.numpy as jnp
from jax.experimental import pallas as pl
from jax.experimental.pallas import tpu as pltpu


# ----------------------------------------------------------------------------
# Kernel: fused 3x3 "same" conv + bias + ReLU on one (TILE_H, W) row tile.
# ----------------------------------------------------------------------------
def _conv3x3_relu_kernel(xa_ref, halo_ref, w_ref, b_ref, m_ref, o_ref,
                         win_ref, s_ref, *, width):
    # xa_ref  : (1, C_in, L)         main tile, rows [t*TH, t*TH+TH), lanes = flat H*W
    # halo_ref: (1, 1, 2, C_in, W)   [0]=row above the tile (or 0), [1]=row below (or 0)
    # w_ref   : (C_out, 9*C_in)      3x3 taps folded into the contraction dim
    # b_ref   : (C_out, 1)           bias
    # m_ref   : (2, L)               lane masks: row 0 kills w==0, row 1 kills w==W-1
    # o_ref   : (1, C_out, L)        output tile (lane-dense stores)
    # win_ref : (C_in, L + 2W + 2)   scratch: [guard | top halo | tile | bottom halo | guard]
    # s_ref   : (9*C_in, L)          scratch: stacked shifted activations
    W = width
    c_in, L = xa_ref.shape[1], xa_ref.shape[2]
    dt = win_ref.dtype

    # Stitch the working window.  Every lane is written each step, so there
    # are no stale-VMEM reads; the guard lanes keep all 9 shifted slices in
    # bounds (the values read there are zeroed by the edge masks anyway).
    win_ref[:, 0:1] = jnp.zeros((c_in, 1), dt)
    win_ref[:, 1:1 + W] = halo_ref[0, 0, 0]
    win_ref[:, 1 + W:1 + W + L] = xa_ref[0]
    win_ref[:, 1 + W + L:1 + 2 * W + L] = halo_ref[0, 0, 1]
    win_ref[:, 1 + 2 * W + L:2 + 2 * W + L] = jnp.zeros((c_in, 1), dt)

    m_first = m_ref[0:1, :]            # zeroes output columns with w == 0     (kw = 0)
    m_last = m_ref[1:2, :]             # zeroes output columns with w == W - 1 (kw = 2)

    # Build the (9*C_in, L) stacked activation block: tap (kh, kw) is the
    # window shifted by kh*W + kw lanes; the left/right W-edge wrap-around is
    # zeroed while writing the kw=0 / kw=2 slabs.
    for kh in range(3):
        for kw in range(3):
            tap = kh * 3 + kw
            start = kh * W + kw                         # static lane offset
            xs = win_ref[:, start:start + L]            # (C_in, L) shifted view
            if kw == 0:
                xs = xs * m_first
            elif kw == 2:
                xs = xs * m_last
            s_ref[tap * c_in:(tap + 1) * c_in, :] = xs

    # One MXU contraction with K = 9*C_in instead of 9 starved K=C_in matmuls.
    acc = jnp.dot(w_ref[...], s_ref[...], preferred_element_type=jnp.float32)
    o_ref[0] = jnp.maximum(acc + b_ref[...], 0.0).astype(o_ref.dtype)


# ----------------------------------------------------------------------------
# Wrapper: generation-aware tiling, compact halo, BlockSpecs.
# ----------------------------------------------------------------------------
def _vmem_capacity_bytes():
    try:
        return int(pltpu.get_tpu_info().vmem_capacity_bytes)
    except Exception:
        return 64 * 1024 * 1024      # conservative: v7x per-core physical VMEM


def _vmem_need_bytes(TH, W, C_in, C_out, in_isz, out_isz):
    L = TH * W
    stream = 2 * (C_in * L + 2 * C_in * W) * in_isz       # x tile + halo, double-buffered
    stream += 2 * C_out * L * out_isz                     # output, double-buffered
    scratch = (C_in * (L + 2 * W + 2) + 9 * C_in * L) * in_isz
    resident = (9 * C_out * C_in + 2 * L + C_out) * in_isz
    return stream + scratch + resident


def _pick_tile_h(N, H, W, C_in, C_out, budget, in_isz, out_isz):
    """Largest TILE_H dividing H with TILE_H*W lane-dense (mult of 128, or the
    full image) whose per-step VMEM footprint fits the per-chip budget."""
    valid = [th for th in range(1, H + 1)
             if H % th == 0 and ((th * W) % 128 == 0 or th == H)]
    if not valid:
        raise ValueError(f"No valid row tile for H={H}, W={W}")
    fits = [th for th in valid
            if _vmem_need_bytes(th, W, C_in, C_out, in_isz, out_isz) <= budget]
    cands = fits if fits else valid[:1]     # smallest valid tile as last resort
    best = max(cands)
    # v7x has 2 TensorCores; when the batch axis alone can't give an even
    # grid split, prefer the largest tile that yields an even row-tile count.
    if N % 2 == 1:
        even = [th for th in cands if (H // th) % 2 == 0]
        if even:
            best = max(even)
    return best


def feature_extraction_module(x, weight, bias, *, tile_h=None,
                              compute_dtype=None, out_dtype=jnp.float32):
    """Conv2d(C_in->C_out, 3x3, padding=1) + bias + ReLU.  NCHW in / NCHW out."""
    N, C_in, H, W = x.shape
    C_out = weight.shape[0]
    assert weight.shape == (C_out, C_in, 3, 3), weight.shape

    # Optional bf16 path (halves HBM bytes; MXU accumulation stays f32).
    cdtype = jnp.dtype(compute_dtype if compute_dtype is not None else jnp.float32)
    x = x.astype(cdtype)
    weight = weight.astype(cdtype)
    bias = bias.astype(jnp.float32)          # added to the f32 accumulator

    in_isz = cdtype.itemsize
    out_isz = jnp.dtype(out_dtype).itemsize
    vmem_cap = _vmem_capacity_bytes()

    TH = (_pick_tile_h(N, H, W, C_in, C_out, int(0.6 * vmem_cap), in_isz, out_isz)
          if tile_h is None else tile_h)
    assert H % TH == 0 and ((TH * W) % 128 == 0 or TH == H), (TH, H, W)
    nT = H // TH
    L = TH * W

    # Input stays NCHW; the spatial flatten is a free contiguous reshape, so
    # there is no padded HBM copy and each element is read exactly once.
    x_flat = x.reshape(N, C_in, H * W)

    # Compact per-tile halo: just the single row above and below each tile
    # (zero rows at the image border) — 2/TH of the input instead of a full
    # second fetch of every tile.
    zrow = jnp.zeros((N, C_in, 1, W), cdtype)
    if nT > 1:
        tops = jnp.concatenate([zrow, x[:, :, TH - 1:H - 1:TH, :]], axis=2)  # (N,C_in,nT,W)
        bots = jnp.concatenate([x[:, :, TH::TH, :], zrow], axis=2)           # (N,C_in,nT,W)
    else:
        tops, bots = zrow, zrow
    halo = jnp.stack([tops, bots], axis=3).transpose(0, 2, 3, 1, 4)  # (N,nT,2,C_in,W)

    # Fold taps into the contraction dim; column order (kh*3+kw)*C_in + c
    # matches the stacked activation scratch built in the kernel.
    w_folded = weight.transpose(0, 2, 3, 1).reshape(C_out, 9 * C_in)
    b2 = bias.reshape(C_out, 1)

    col = jnp.arange(L, dtype=jnp.int32) % W
    edge = jnp.stack([col != 0, col != W - 1]).astype(cdtype)        # (2, L)

    flops = 2 * 9 * C_in * C_out * N * H * W
    bytes_accessed = (in_isz * (N * C_in * H * W + 2 * N * nT * C_in * W
                                + 9 * C_out * C_in + C_out + 2 * L)
                      + out_isz * N * C_out * H * W)

    need = _vmem_need_bytes(TH, W, C_in, C_out, in_isz, out_isz)
    vmem_limit = int(min(0.9 * vmem_cap, max(32 * 1024 * 1024, 2 * need)))

    out_flat = pl.pallas_call(
        functools.partial(_conv3x3_relu_kernel, width=W),
        out_shape=jax.ShapeDtypeStruct((N, C_out, H * W), out_dtype),
        grid=(N, nT),
        in_specs=[
            pl.BlockSpec((1, C_in, L), lambda n, t: (n, 0, t)),               # streamed tile
            pl.BlockSpec((1, 1, 2, C_in, W), lambda n, t: (n, t, 0, 0, 0)),   # 2-row halo
            pl.BlockSpec((C_out, 9 * C_in), lambda n, t: (0, 0)),             # resident
            pl.BlockSpec((C_out, 1), lambda n, t: (0, 0)),                    # resident
            pl.BlockSpec((2, L), lambda n, t: (0, 0)),                        # resident
        ],
        out_specs=pl.BlockSpec((1, C_out, L), lambda n, t: (n, 0, t)),
        scratch_shapes=[
            pltpu.VMEM((C_in, L + 2 * W + 2), cdtype),   # stitched working window
            pltpu.VMEM((9 * C_in, L), cdtype),           # stacked activations (K = 9*C_in)
        ],
        compiler_params=pltpu.CompilerParams(
            dimension_semantics=("parallel", "parallel"),
            vmem_limit_bytes=vmem_limit),
        cost_estimate=pl.CostEstimate(
            flops=flops, transcendentals=0, bytes_accessed=bytes_accessed),
    )(x_flat, halo, w_folded, b2, edge)

    # (N, C_out, H*W) -> (N, C_out, H, W): contiguous reshape, no transpose.
    return out_flat.reshape(N, C_out, H, W)


def module_wrapper_feature_extraction(dummy_arg, prev_spectrogram, weight, bias,
                                      *, tile_h=None, compute_dtype=None):
    """Pallas/JAX equivalent of ModuleWrapperFeatureExtraction.forward."""
    # TODO(synk): the dummy-arg trick only exists to enable torch checkpointing;
    # the JAX analogue is jax.checkpoint around this call, not a kernel change.
    assert dummy_arg is not None
    return feature_extraction_module(prev_spectrogram, weight, bias,
                                     tile_h=tile_h, compute_dtype=compute_dtype)


# ----------------------------------------------------------------------------
# Main
# ----------------------------------------------------------------------------
if __name__ == "__main__":
    key = jax.random.PRNGKey(0)
    k1, k2, k3 = jax.random.split(key, 3)

    # Small spectrogram-like input, NCHW (matches the PyTorch module).
    N, C_in, H, W = 2, 4, 16, 16
    C_out = 8
    x = jax.random.normal(k1, (N, C_in, H, W), dtype=jnp.float32)
    weight = 0.1 * jax.random.normal(k2, (C_out, C_in, 3, 3), dtype=jnp.float32)
    bias = 0.01 * jax.random.normal(k3, (C_out,), dtype=jnp.float32)

    # dummy_arg only needs to be non-None (checkpointing trick in PyTorch).
    dummy = jnp.zeros((1,), dtype=jnp.float32)

    # Reference in plain JAX (conv + bias + relu).
    ref = jax.lax.conv_general_dilated(
        x, weight, window_strides=(1, 1), padding="SAME",
        dimension_numbers=("NCHW", "OIHW", "NCHW"))
    ref = jnp.maximum(ref + bias.reshape(1, C_out, 1, 1), 0.0)

    # 1) Forced tile_h=8 -> grid (N, 2): exercises the compact cross-tile halo.
    fwd_tiled = jax.jit(functools.partial(module_wrapper_feature_extraction, tile_h=8))
    out_tiled = jax.block_until_ready(fwd_tiled(dummy, x, weight, bias))
    assert out_tiled.shape == (N, C_out, H, W), out_tiled.shape
    assert out_tiled.dtype == jnp.float32
    assert jnp.allclose(out_tiled, ref, atol=1e-4, rtol=1e-4), \
        float(jnp.max(jnp.abs(out_tiled - ref)))

    # 2) Auto tile selection (single row tile here, border halos are zeros).
    fwd_auto = jax.jit(module_wrapper_feature_extraction)
    out_auto = jax.block_until_ready(fwd_auto(dummy, x, weight, bias))
    assert jnp.allclose(out_auto, ref, atol=1e-4, rtol=1e-4), \
        float(jnp.max(jnp.abs(out_auto - ref)))

    print("KERNEL_OK")
</pallas_src>

<mosaic_0001>
module attributes {stable_mosaic.version = 11 : i64} {
  func.func @_conv3x3_relu_kernel(%arg0: i32, %arg1: i32, %arg2: memref<1x4x128xf32, #tpu.memory_space<vmem>>, %arg3: memref<1x1x2x4x16xf32, #tpu.memory_space<vmem>>, %arg4: memref<8x36xf32, #tpu.memory_space<vmem>>, %arg5: memref<8x1xf32, #tpu.memory_space<vmem>>, %arg6: memref<2x128xf32, #tpu.memory_space<vmem>>, %arg7: memref<1x8x128xf32, #tpu.memory_space<vmem>>, %arg8: memref<4x162xf32, #tpu.memory_space<vmem>>, %arg9: memref<36x128xf32, #tpu.memory_space<vmem>>) attributes {dimension_semantics = [#tpu.dimension_semantics<parallel>, #tpu.dimension_semantics<parallel>], iteration_bounds = array<i64: 2, 2>, scalar_prefetch = 0 : i64, scratch_operands = 2 : i64, tpu.core_type = #tpu.core_type<tc>, window_params = [{transform_indices = @transform_0, window_bounds = array<i64: 1, 4, 128>}, {transform_indices = @transform_1, window_bounds = array<i64: 1, 1, 2, 4, 16>}, {pipeline_mode = #tpu.pipeline_mode<synchronous>, transform_indices = @transform_2, window_bounds = array<i64: 8, 36>}, {pipeline_mode = #tpu.pipeline_mode<synchronous>, transform_indices = @transform_3, window_bounds = array<i64: 8, 1>}, {pipeline_mode = #tpu.pipeline_mode<synchronous>, transform_indices = @transform_4, window_bounds = array<i64: 2, 128>}, {transform_indices = @transform_5, window_bounds = array<i64: 1, 8, 128>}]} {
    %cst = arith.constant 0.000000e+00 : f32
    %0 = vector.broadcast %cst : f32 to vector<4x1xf32>
    %c0 = arith.constant 0 : index
    %c0_0 = arith.constant 0 : index
    %1 = vector.load %arg8[%c0, %c0_0] : memref<4x162xf32, #tpu.memory_space<vmem>>, vector<4x1xf32>
    tpu.vector_store %arg8[%c0, %c0_0], %0 {strides = array<i32>} : memref<4x162xf32, #tpu.memory_space<vmem>>, vector<4x1xf32>,
    %c0_1 = arith.constant 0 : index
    %c0_2 = arith.constant 0 : index
    %c0_3 = arith.constant 0 : index
    %c0_4 = arith.constant 0 : index
    %c0_5 = arith.constant 0 : index
    %2 = vector.load %arg3[%c0_1, %c0_2, %c0_3, %c0_4, %c0_5] : memref<1x1x2x4x16xf32, #tpu.memory_space<vmem>>, vector<1x1x1x4x16xf32>
    %3 = vector.shape_cast %2 : vector<1x1x1x4x16xf32> to vector<4x16xf32>
    %c0_6 = arith.constant 0 : index
    %c1 = arith.constant 1 : index
    %4 = vector.load %arg8[%c0_6, %c1] : memref<4x162xf32, #tpu.memory_space<vmem>>, vector<4x16xf32>
    tpu.vector_store %arg8[%c0_6, %c1], %3 {strides = array<i32>} : memref<4x162xf32, #tpu.memory_space<vmem>>, vector<4x16xf32>,
    %c0_7 = arith.constant 0 : index
    %c0_8 = arith.constant 0 : index
    %c0_9 = arith.constant 0 : index
    %5 = vector.load %arg2[%c0_7, %c0_8, %c0_9] : memref<1x4x128xf32, #tpu.memory_space<vmem>>, vector<1x4x128xf32>
    %6 = vector.shape_cast %5 : vector<1x4x128xf32> to vector<4x128xf32>
    %c0_10 = arith.constant 0 : index
    %c17 = arith.constant 17 : index
    %7 = vector.load %arg8[%c0_10, %c17] : memref<4x162xf32, #tpu.memory_space<vmem>>, vector<4x128xf32>
    tpu.vector_store %arg8[%c0_10, %c17], %6 {strides = array<i32>} : memref<4x162xf32, #tpu.memory_space<vmem>>, vector<4x128xf32>,
    %c0_11 = arith.constant 0 : index
    %c0_12 = arith.constant 0 : index
    %c1_13 = arith.constant 1 : index
    %c0_14 = arith.constant 0 : index
    %c0_15 = arith.constant 0 : index
    %8 = vector.load %arg3[%c0_11, %c0_12, %c1_13, %c0_14, %c0_15] : memref<1x1x2x4x16xf32, #tpu.memory_space<vmem>>, vector<1x1x1x4x16xf32>
    %9 = vector.shape_cast %8 : vector<1x1x1x4x16xf32> to vector<4x16xf32>
    %c0_16 = arith.constant 0 : index
    %c145 = arith.constant 145 : index
    %10 = vector.load %arg8[%c0_16, %c145] : memref<4x162xf32, #tpu.memory_space<vmem>>, vector<4x16xf32>
    tpu.vector_store %arg8[%c0_16, %c145], %9 {strides = array<i32>} : memref<4x162xf32, #tpu.memory_space<vmem>>, vector<4x16xf32>,
    %cst_17 = arith.constant 0.000000e+00 : f32
    %11 = vector.broadcast %cst_17 : f32 to vector<4x1xf32>
    %c0_18 = arith.constant 0 : index
    %c161 = arith.constant 161 : index
    %12 = vector.load %arg8[%c0_18, %c161] : memref<4x162xf32, #tpu.memory_space<vmem>>, vector<4x1xf32>
    tpu.vector_store %arg8[%c0_18, %c161], %11 {strides = array<i32>} : memref<4x162xf32, #tpu.memory_space<vmem>>, vector<4x1xf32>,
    %c0_19 = arith.constant 0 : index
    %c0_20 = arith.constant 0 : index
    %13 = vector.load %arg6[%c0_19, %c0_20] : memref<2x128xf32, #tpu.memory_space<vmem>>, vector<1x128xf32>
    %c1_21 = arith.constant 1 : index
    %c0_22 = arith.constant 0 : index
    %14 = vector.load %arg6[%c1_21, %c0_22] : memref<2x128xf32, #tpu.memory_space<vmem>>, vector<1x128xf32>
    %c0_23 = arith.constant 0 : index
    %c0_24 = arith.constant 0 : index
    %15 = vector.load %arg8[%c0_23, %c0_24] : memref<4x162xf32, #tpu.memory_space<vmem>>, vector<4x128xf32>
    %16 = vector.broadcast %13 : vector<1x128xf32> to vector<4x128xf32>
    %17 = arith.mulf %15, %16 : vector<4x128xf32>
    %c0_25 = arith.constant 0 : index
    %c0_26 = arith.constant 0 : index
    %18 = vector.load %arg9[%c0_25, %c0_26] : memref<36x128xf32, #tpu.memory_space<vmem>>, vector<4x128xf32>
    tpu.vector_store %arg9[%c0_25, %c0_26], %17 {strides = array<i32>} : memref<36x128xf32, #tpu.memory_space<vmem>>, vector<4x128xf32>,
    %c0_27 = arith.constant 0 : index
    %c1_28 = arith.constant 1 : index
    %19 = vector.load %arg8[%c0_27, %c1_28] : memref<4x162xf32, #tpu.memory_space<vmem>>, vector<4x128xf32>
    %c4 = arith.constant 4 : index
    %c0_29 = arith.constant 0 : index
    %20 = vector.load %arg9[%c4, %c0_29] : memref<36x128xf32, #tpu.memory_space<vmem>>, vector<4x128xf32>
    tpu.vector_store %arg9[%c4, %c0_29], %19 {strides = array<i32>} : memref<36x128xf32, #tpu.memory_space<vmem>>, vector<4x128xf32>,
    %c0_30 = arith.constant 0 : index
    %c2 = arith.constant 2 : index
    %21 = vector.load %arg8[%c0_30, %c2] : memref<4x162xf32, #tpu.memory_space<vmem>>, vector<4x128xf32>
    %22 = vector.broadcast %14 : vector<1x128xf32> to vector<4x128xf32>
    %23 = arith.mulf %21, %22 : vector<4x128xf32>
    %c8 = arith.constant 8 : index
    %c0_31 = arith.constant 0 : index
    %24 = vector.load %arg9[%c8, %c0_31] : memref<36x128xf32, #tpu.memory_space<vmem>>, vector<4x128xf32>
    tpu.vector_store %arg9[%c8, %c0_31], %23 {strides = array<i32>} : memref<36x128xf32, #tpu.memory_space<vmem>>, vector<4x128xf32>,
    %c0_32 = arith.constant 0 : index
    %c16 = arith.constant 16 : index
    %25 = vector.load %arg8[%c0_32, %c16] : memref<4x162xf32, #tpu.memory_space<vmem>>, vector<4x128xf32>
    %26 = vector.broadcast %13 : vector<1x128xf32> to vector<4x128xf32>
    %27 = arith.mulf %25, %26 : vector<4x128xf32>
    %c12 = arith.constant 12 : index
    %c0_33 = arith.constant 0 : index
    %28 = vector.load %arg9[%c12, %c0_33] : memref<36x128xf32, #tpu.memory_space<vmem>>, vector<4x128xf32>
    tpu.vector_store %arg9[%c12, %c0_33], %27 {strides = array<i32>} : memref<36x128xf32, #tpu.memory_space<vmem>>, vector<4x128xf32>,
    %c0_34 = arith.constant 0 : index
    %c17_35 = arith.constant 17 : index
    %29 = vector.load %arg8[%c0_34, %c17_35] : memref<4x162xf32, #tpu.memory_space<vmem>>, vector<4x128xf32>
    %c16_36 = arith.constant 16 : index
    %c0_37 = arith.constant 0 : index
    %30 = vector.load %arg9[%c16_36, %c0_37] : memref<36x128xf32, #tpu.memory_space<vmem>>, vector<4x128xf32>
    tpu.vector_store %arg9[%c16_36, %c0_37], %29 {strides = array<i32>} : memref<36x128xf32, #tpu.memory_space<vmem>>, vector<4x128xf32>,
    %c0_38 = arith.constant 0 : index
    %c18 = arith.constant 18 : index
    %31 = vector.load %arg8[%c0_38, %c18] : memref<4x162xf32, #tpu.memory_space<vmem>>, vector<4x128xf32>
    %32 = vector.broadcast %14 : vector<1x128xf32> to vector<4x128xf32>
    %33 = arith.mulf %31, %32 : vector<4x128xf32>
    %c20 = arith.constant 20 : index
    %c0_39 = arith.constant 0 : index
    %34 = vector.load %arg9[%c20, %c0_39] : memref<36x128xf32, #tpu.memory_space<vmem>>, vector<4x128xf32>
    tpu.vector_store %arg9[%c20, %c0_39], %33 {strides = array<i32>} : memref<36x128xf32, #tpu.memory_space<vmem>>, vector<4x128xf32>,
    %c0_40 = arith.constant 0 : index
    %c32 = arith.constant 32 : index
    %35 = vector.load %arg8[%c0_40, %c32] : memref<4x162xf32, #tpu.memory_space<vmem>>, vector<4x128xf32>
    %36 = vector.broadcast %13 : vector<1x128xf32> to vector<4x128xf32>
    %37 = arith.mulf %35, %36 : vector<4x128xf32>
    %c24 = arith.constant 24 : index
    %c0_41 = arith.constant 0 : index
    %38 = vector.load %arg9[%c24, %c0_41] : memref<36x128xf32, #tpu.memory_space<vmem>>, vector<4x128xf32>
    tpu.vector_store %arg9[%c24, %c0_41], %37 {strides = array<i32>} : memref<36x128xf32, #tpu.memory_space<vmem>>, vector<4x128xf32>,
    %c0_42 = arith.constant 0 : index
    %c33 = arith.constant 33 : index
    %39 = vector.load %arg8[%c0_42, %c33] : memref<4x162xf32, #tpu.memory_space<vmem>>, vector<4x128xf32>
    %c28 = arith.constant 28 : index
    %c0_43 = arith.constant 0 : index
    %40 = vector.load %arg9[%c28, %c0_43] : memref<36x128xf32, #tpu.memory_space<vmem>>, vector<4x128xf32>
    tpu.vector_store %arg9[%c28, %c0_43], %39 {strides = array<i32>} : memref<36x128xf32, #tpu.memory_space<vmem>>, vector<4x128xf32>,
    %c0_44 = arith.constant 0 : index
    %c34 = arith.constant 34 : index
    %41 = vector.load %arg8[%c0_44, %c34] : memref<4x162xf32, #tpu.memory_space<vmem>>, vector<4x128xf32>
    %42 = vector.broadcast %14 : vector<1x128xf32> to vector<4x128xf32>
    %43 = arith.mulf %41, %42 : vector<4x128xf32>
    %c32_45 = arith.constant 32 : index
    %c0_46 = arith.constant 0 : index
    %44 = vector.load %arg9[%c32_45, %c0_46] : memref<36x128xf32, #tpu.memory_space<vmem>>, vector<4x128xf32>
    tpu.vector_store %arg9[%c32_45, %c0_46], %43 {strides = array<i32>} : memref<36x128xf32, #tpu.memory_space<vmem>>, vector<4x128xf32>,
    %c0_47 = arith.constant 0 : index
    %c0_48 = arith.constant 0 : index
    %45 = vector.load %arg4[%c0_47, %c0_48] : memref<8x36xf32, #tpu.memory_space<vmem>>, vector<8x36xf32>
    %c0_49 = arith.constant 0 : index
    %c0_50 = arith.constant 0 : index
    %46 = vector.load %arg9[%c0_49, %c0_50] : memref<36x128xf32, #tpu.memory_space<vmem>>, vector<36x128xf32>
    %cst_51 = arith.constant dense<0.000000e+00> : vector<8x128xf32>
    %47 = tpu.matmul %45, %46, %cst_51 {dimension_numbers = #tpu.dot_dimension_numbers<[1], [0], [0], [1], [0, 0, 1, 1], [], []>} : vector<8x36xf32>, vector<36x128xf32>, vector<8x128xf32> -> vector<8x128xf32>
    %c0_52 = arith.constant 0 : index
    %c0_53 = arith.constant 0 : index
    %48 = vector.load %arg5[%c0_52, %c0_53] : memref<8x1xf32, #tpu.memory_space<vmem>>, vector<8x1xf32>
    %49 = vector.broadcast %48 : vector<8x1xf32> to vector<8x128xf32>
    %50 = arith.addf %47, %49 : vector<8x128xf32>
    %cst_54 = arith.constant 0.000000e+00 : f32
    %51 = vector.broadcast %cst_54 : f32 to vector<8x128xf32>
    %52 = arith.maximumf %50, %51 : vector<8x128xf32>
    %c0_55 = arith.constant 0 : index
    %c0_56 = arith.constant 0 : index
    %c0_57 = arith.constant 0 : index
    %53 = vector.load %arg7[%c0_55, %c0_56, %c0_57] : memref<1x8x128xf32, #tpu.memory_space<vmem>>, vector<1x8x128xf32>
    %54 = vector.shape_cast %53 : vector<1x8x128xf32> to vector<8x128xf32>
    %55 = vector.shape_cast %52 : vector<8x128xf32> to vector<1x8x128xf32>
    tpu.vector_store %arg7[%c0_55, %c0_56, %c0_57], %55 {strides = array<i32>} : memref<1x8x128xf32, #tpu.memory_space<vmem>>, vector<1x8x128xf32>,
    return
  }
  func.func @transform_0(%arg0: i32, %arg1: i32) -> (i32, i32, i32) {
    %c0_i32 = arith.constant 0 : i32
    %c0_i32_0 = arith.constant 0 : i32
    return %arg0, %c0_i32, %arg1 : i32, i32, i32
  }
  func.func @transform_1(%arg0: i32, %arg1: i32) -> (i32, i32, i32, i32, i32) {
    %c0_i32 = arith.constant 0 : i32
    %c0_i32_0 = arith.constant 0 : i32
    %c0_i32_1 = arith.constant 0 : i32
    %c0_i32_2 = arith.constant 0 : i32
    return %arg0, %arg1, %c0_i32, %c0_i32_0, %c0_i32_1 : i32, i32, i32, i32, i32
  }
  func.func @transform_2(%arg0: i32, %arg1: i32) -> (i32, i32) {
    %c0_i32 = arith.constant 0 : i32
    %c0_i32_0 = arith.constant 0 : i32
    %c0_i32_1 = arith.constant 0 : i32
    return %c0_i32, %c0_i32_0 : i32, i32
  }
  func.func @transform_3(%arg0: i32, %arg1: i32) -> (i32, i32) {
    %c0_i32 = arith.constant 0 : i32
    %c0_i32_0 = arith.constant 0 : i32
    %c0_i32_1 = arith.constant 0 : i32
    return %c0_i32, %c0_i32_0 : i32, i32
  }
  func.func @transform_4(%arg0: i32, %arg1: i32) -> (i32, i32) {
    %c0_i32 = arith.constant 0 : i32
    %c0_i32_0 = arith.constant 0 : i32
    %c0_i32_1 = arith.constant 0 : i32
    return %c0_i32, %c0_i32_0 : i32, i32
  }
  func.func @transform_5(%arg0: i32, %arg1: i32) -> (i32, i32, i32) {
    %c0_i32 = arith.constant 0 : i32
    %c0_i32_0 = arith.constant 0 : i32
    return %arg0, %c0_i32, %arg1 : i32, i32, i32
  }
}

</mosaic_0001>

<llo_original>
// kernel: module_wrapper_feature_extraction.1
$region0: #{module_wrapper_feature_extraction.1}
  #allocation0 [shape = 'u32[]', space=smem, size = 0x4, offset = 0x4, fixed_abs, tag = 'smem constant byte address 0x4 - core index']
  #allocation1 [shape = 'u32[144,128]{1,0:T(1,128)}', space=vmem, size = 0x12000, scoped, tag = 'internal scratch']
  #allocation2 [shape = 'f32[4,162]{1,0:T(4,128)}', space=vmem, size = 0x1000, scoped, tag = 'scratch operand']
  #allocation3 [shape = 'f32[36,128]{1,0:T(8,128)}', space=vmem, size = 0x5000, scoped, tag = 'scratch operand']
  %s0 = inlined_call_operand.vmem [shape: f32[2,4,256], index: 0, kind: input, shape index: {}]
  %s1 = inlined_call_operand.vmem [shape: f32[2,2,2,4,16], index: 1, kind: input, shape index: {}]
  %s2 = inlined_call_operand.vmem [shape: f32[8,36], index: 2, kind: input, shape index: {}]
  %s3 = inlined_call_operand.vmem [shape: f32[8,1], index: 3, kind: input, shape index: {}]
  %s4 = inlined_call_operand.vmem [shape: f32[2,128], index: 4, kind: input, shape index: {}]
  %s5 = inlined_call_operand.vmem [shape: f32[2,8,256], index: 5, kind: output, shape index: {}]
  %s6 = sld [smem:[#allocation0]]
  $region53: #{module_wrapper_feature_extraction.1} parent=0
    _
  %s8 = ssub.s32 1, %s6
  %s9 = scalar_select 0, %s8, %s6
  loop: start=0, step=1, limit=6
  $region2: #{module_wrapper_feature_extraction.1} parent=0 // loop_pre_header
    _
  $region3: #{module_wrapper_feature_extraction.1} parent=0 // loop_header
    %s11 = sphi 0, %s15
    %p12 = scmp.ge.s32.totalorder %s11, 6
    %s18 = sphi 0, %s30
    %s19 = sphi 0, %s26
    %s20 = sphi 0, %s18
    %s21 = sphi 0, %s19
    %s22 = sphi 0, %s20
    %s23 = sphi 0, %s21
    %s35 = sphi 0, %s37
    %s38 = sphi 0, %s35
    %s39 = sphi 0, %s38
    %s55 = sphi 0, %s39
    %s63 = sphi 0, %s65
    %s66 = sphi 0, %s63
    %s67 = sphi 0, %s66
    %s83 = sphi 0, %s67
    %s87 = sphi 0, %s87
    %s89 = sphi 0, %s87
    %s90 = sphi 0, %s89
    %s104 = sphi 0, %s90
    %s108 = sphi 0, %s108
    %s110 = sphi 0, %s108
    %s111 = sphi 0, %s110
    %s125 = sphi 0, %s111
    %s129 = sphi 0, %s129
    %s131 = sphi 0, %s129
    %s132 = sphi 0, %s131
    %s146 = sphi 0, %s132
    %s154 = sphi 0, %s156
    %s157 = sphi 0, %s154
    %s158 = sphi 0, %s157
    %s174 = sphi 0, %s158
  $region4: #{module_wrapper_feature_extraction.1} parent=0 // loop_header_branch
    %14 = sbr.rel (%p12) target = $region8
  $region5: #{module_wrapper_feature_extraction.1} parent=0 // loop_body
    %s16 = ssub.s32 %s11, 1
    %s17 = ssub.s32 %s11, 2
    %s24 = sadd.s32 1, %s19
    %p25 = scmp.ge.s32.totalorder %s24, 2
    %s26 = scalar_select %p25, 0, %s24
    %s27 = sadd.s32 1, %s18
    %s28 = scalar_select %p25, %s27, %s18
    %p29 = scmp.ge.s32.totalorder %s28, 2
    %s30 = scalar_select %p29, 0, %s28
    %s31 = ssub.s32 %s18, %s30
    %s32 = ssub.s32 %s19, %s26
    %s33 = sor.u32 %s31, %s32
    %p34 = scmp.eq.s32.totalorder %s33, 0
    %s36 = sadd.s32 %s35, 1
    %s37 = scalar_select %p34, %s35, %s36
    %p40 = pneg %p34
    %p41 = scmp.eq.s32.totalorder %s11, 3
    %p42 = por %p40, %p41
    %p43 = scmp.ne.s32.totalorder %s35, %s38
    %p44 = scmp.eq.s32.totalorder %s11, 0
    %p45 = por %p43, %p44
    %p46 = scmp.ne.s32.totalorder %s35, %s38
    %p47 = scmp.eq.s32.totalorder %s16, 3
    %p48 = por %p46, %p47
    %p49 = scmp.ne.s32.totalorder %s38, %s39
    %p50 = scmp.eq.s32.totalorder %s16, 0
    %p51 = por %p49, %p50
    %p52 = scmp.ne.s32.totalorder %s38, %s39
    %p53 = scmp.eq.s32.totalorder %s17, 3
    %p54 = por %p52, %p53
    %p56 = scmp.ne.s32.totalorder %s39, %s55
    %p57 = scmp.eq.s32.totalorder %s17, 0
    %p58 = por %p56, %p57
    %s59 = ssub.s32 %s18, %s30
    %s60 = ssub.s32 %s19, %s26
    %s61 = sor.u32 %s59, %s60
    %p62 = scmp.eq.s32.totalorder %s61, 0
    %s64 = sadd.s32 %s63, 1
    %s65 = scalar_select %p62, %s63, %s64
    %p68 = pneg %p62
    %p69 = scmp.eq.s32.totalorder %s11, 3
    %p70 = por %p68, %p69
    %p71 = scmp.ne.s32.totalorder %s63, %s66
    %p72 = scmp.eq.s32.totalorder %s11, 0
    %p73 = por %p71, %p72
    %p74 = scmp.ne.s32.totalorder %s63, %s66
    %p75 = scmp.eq.s32.totalorder %s16, 3
    %p76 = por %p74, %p75
    %p77 = scmp.ne.s32.totalorder %s66, %s67
    %p78 = scmp.eq.s32.totalorder %s16, 0
    %p79 = por %p77, %p78
    %p80 = scmp.ne.s32.totalorder %s66, %s67
    %p81 = scmp.eq.s32.totalorder %s17, 3
    %p82 = por %p80, %p81
    %p84 = scmp.ne.s32.totalorder %s67, %s83
    %p85 = scmp.eq.s32.totalorder %s17, 0
    %p86 = por %p84, %p85
    %s88 = sadd.s32 %s87, 1
    %p91 = scmp.eq.s32.totalorder %s11, 3
    %p92 = scmp.ne.s32.totalorder %s87, %s89
    %p93 = scmp.eq.s32.totalorder %s11, 0
    %p94 = por %p92, %p93
    %p95 = scmp.ne.s32.totalorder %s87, %s89
    %p96 = scmp.eq.s32.totalorder %s16, 3
    %p97 = por %p95, %p96
    %p98 = scmp.ne.s32.totalorder %s89, %s90
    %p99 = scmp.eq.s32.totalorder %s16, 0
    %p100 = por %p98, %p99
    %p101 = scmp.ne.s32.totalorder %s89, %s90
    %p102 = scmp.eq.s32.totalorder %s17, 3
    %p103 = por %p101, %p102
    %p105 = scmp.ne.s32.totalorder %s90, %s104
    %p106 = scmp.eq.s32.totalorder %s17, 0
    %p107 = por %p105, %p106
    %s109 = sadd.s32 %s108, 1
    %p112 = scmp.eq.s32.totalorder %s11, 3
    %p113 = scmp.ne.s32.totalorder %s108, %s110
    %p114 = scmp.eq.s32.totalorder %s11, 0
    %p115 = por %p113, %p114
    %p116 = scmp.ne.s32.totalorder %s108, %s110
    %p117 = scmp.eq.s32.totalorder %s16, 3
    %p118 = por %p116, %p117
    %p119 = scmp.ne.s32.totalorder %s110, %s111
    %p120 = scmp.eq.s32.totalorder %s16, 0
    %p121 = por %p119, %p120
    %p122 = scmp.ne.s32.totalorder %s110, %s111
    %p123 = scmp.eq.s32.totalorder %s17, 3
    %p124 = por %p122, %p123
    %p126 = scmp.ne.s32.totalorder %s111, %s125
    %p127 = scmp.eq.s32.totalorder %s17, 0
    %p128 = por %p126, %p127
    %s130 = sadd.s32 %s129, 1
    %p133 = scmp.eq.s32.totalorder %s11, 3
    %p134 = scmp.ne.s32.totalorder %s129, %s131
    %p135 = scmp.eq.s32.totalorder %s11, 0
    %p136 = por %p134, %p135
    %p137 = scmp.ne.s32.totalorder %s129, %s131
    %p138 = scmp.eq.s32.totalorder %s16, 3
    %p139 = por %p137, %p138
    %p140 = scmp.ne.s32.totalorder %s131, %s132
    %p141 = scmp.eq.s32.totalorder %s16, 0
    %p142 = por %p140, %p141
    %p143 = scmp.ne.s32.totalorder %s131, %s132
    %p144 = scmp.eq.s32.totalorder %s17, 3
    %p145 = por %p143, %p144
    %p147 = scmp.ne.s32.totalorder %s132, %s146
    %p148 = scmp.eq.s32.totalorder %s17, 0
    %p149 = por %p147, %p148
    %s150 = ssub.s32 %s18, %s30
    %s151 = ssub.s32 %s19, %s26
    %s152 = sor.u32 %s150, %s151
    %p153 = scmp.eq.s32.totalorder %s152, 0
    %s155 = sadd.s32 %s154, 1
    %s156 = scalar_select %p153, %s154, %s155
    %p159 = pneg %p153
    %p160 = scmp.eq.s32.totalorder %s11, 3
    %p161 = por %p159, %p160
    %p162 = scmp.ne.s32.totalorder %s154, %s157
    %p163 = scmp.eq.s32.totalorder %s11, 0
    %p164 = por %p162, %p163
    %p165 = scmp.ne.s32.totalorder %s154, %s157
    %p166 = scmp.eq.s32.totalorder %s16, 3
    %p167 = por %p165, %p166
    %p168 = scmp.ne.s32.totalorder %s157, %s158
    %p169 = scmp.eq.s32.totalorder %s16, 0
    %p170 = por %p168, %p169
    %p171 = scmp.ne.s32.totalorder %s157, %s158
    %p172 = scmp.eq.s32.totalorder %s17, 3
    %p173 = por %p171, %p172
    %p175 = scmp.ne.s32.totalorder %s158, %s174
    %p176 = scmp.eq.s32.totalorder %s17, 0
    %p177 = por %p175, %p176
    %p178 = scmp.le.s32.totalorder 1, %s11
    %p179 = scmp.lt.s32.totalorder %s11, 5
    %p180 = pnand %p178, %p179
    %p181 = pneg %p180
    // Predicated region
    $region9: #{module_wrapper_feature_extraction.1} parent=5 // pred_check
      _
    $region10: #{module_wrapper_feature_extraction.1} parent=5 // pred_check_branch
      %183 = sbr.rel (%p180) target = $region12
    $region11: #{module_wrapper_feature_extraction.1} parent=5 // pred_region
      %s184 = ssub.s32 %s11, 1
      // Predicated region
      $region13: #{module_wrapper_feature_extraction.1} parent=11 // pred_check
        %p185 = pneg %p100
      $region14: #{module_wrapper_feature_extraction.1} parent=11 // pred_check_branch
        %187 = sbr.rel (%p185) target = $region16
      $region15: #{module_wrapper_feature_extraction.1} parent=11 // pred_region
        _
      $region16: #{module_wrapper_feature_extraction.1} parent=11 // pred_fallthru
        _
      // Predicated region
      $region17: #{module_wrapper_feature_extraction.1} parent=11 // pred_check
        %p188 = pneg %p121
      $region18: #{module_wrapper_feature_extraction.1} parent=11 // pred_check_branch
        %190 = sbr.rel (%p188) target = $region20
      $region19: #{module_wrapper_feature_extraction.1} parent=11 // pred_region
        _
      $region20: #{module_wrapper_feature_extraction.1} parent=11 // pred_fallthru
        _
      // Predicated region
      $region21: #{module_wrapper_feature_extraction.1} parent=11 // pred_check
        %p191 = pneg %p142
      $region22: #{module_wrapper_feature_extraction.1} parent=11 // pred_check_branch
        %193 = sbr.rel (%p191) target = $region24
      $region23: #{module_wrapper_feature_extraction.1} parent=11 // pred_region
        _
      $region24: #{module_wrapper_feature_extraction.1} parent=11 // pred_fallthru
        _
    $region12: #{module_wrapper_feature_extraction.1} parent=5 // pred_fallthru
      _
    %p194 = scmp.lt.s32.totalorder %s11, 4
    // Predicated region
    $region25: #{module_wrapper_feature_extraction.1} parent=5 // pred_check
      %p195 = pneg %p194
    $region26: #{module_wrapper_feature_extraction.1} parent=5 // pred_check_branch
      %197 = sbr.rel (%p195) target = $region28
    $region27: #{module_wrapper_feature_extraction.1} parent=5 // pred_region
      // Predicated region
      $region29: #{module_wrapper_feature_extraction.1} parent=27 // pred_check
        %p198 = pneg %p45
      $region30: #{module_wrapper_feature_extraction.1} parent=27 // pred_check_branch
        %200 = sbr.rel (%p198) target = $region32
      $region31: #{module_wrapper_feature_extraction.1} parent=27 // pred_region
        %p201 = scmp.lt.s32.totalorder %s18, 1
        %s202 = scalar_select %p201, %s18, 1
        %p203 = scmp.lt.s32.totalorder %s19, 1
        %s204 = scalar_select %p203, %s19, 1
        %s205 = smul.addr %s202, 2
        %s206 = sadd.s32 %s204, %s205
        %s207 = smul.addr %s206, 4
        %s208 = scalar_lea.vmem %s0, %s207
      $region32: #{module_wrapper_feature_extraction.1} parent=27 // pred_fallthru
        _
      // Predicated region
      $region33: #{module_wrapper_feature_extraction.1} parent=27 // pred_check
        %p209 = pneg %p73
      $region34: #{module_wrapper_feature_extraction.1} parent=27 // pred_check_branch
        %211 = sbr.rel (%p209) target = $region36
      $region35: #{module_wrapper_feature_extraction.1} parent=27 // pred_region
        %p212 = scmp.lt.s32.totalorder %s18, 1
        %s213 = scalar_select %p212, %s18, 1
        %p214 = scmp.lt.s32.totalorder %s19, 1
        %s215 = scalar_select %p214, %s19, 1
        %s216 = smul.addr %s215, 2
        %s217 = smul.addr %s213, 4
        %s218 = sadd.s32 %s216, %s217
        %s219 = smul.addr %s218, 4
        %s220 = scalar_lea.vmem %s1, %s219
      $region36: #{module_wrapper_feature_extraction.1} parent=27 // pred_fallthru
        _
    $region28: #{module_wrapper_feature_extraction.1} parent=5 // pred_fallthru
      _
    %p221 = scmp.le.s32.totalorder 1, %s11
    %p222 = scmp.lt.s32.totalorder %s11, 5
    %p223 = pnand %p221, %p222
    %p224 = pneg %p223
    // Predicated region
    $region37: #{module_wrapper_feature_extraction.1} parent=5 // pred_check
      _
    $region38: #{module_wrapper_feature_extraction.1} parent=5 // pred_check_branch
      %226 = sbr.rel (%p223) target = $region40
    $region39: #{module_wrapper_feature_extraction.1} parent=5 // pred_region
      %s227 = ssub.s32 %s11, 1
      %p228 = scmp.lt.s32.totalorder %s20, 1
      %s229 = scalar_select %p228, %s20, 1
      %p230 = scmp.lt.s32.totalorder %s21, 1
      %s231 = scalar_select %p230, %s21, 1
      %s232 = smul.addr %s229, 2
      %s233 = sadd.s32 %s231, %s232
      %s234 = smul.addr %s233, 4
      %s235 = scalar_lea.vmem %s0, %s234
      %p236 = pneg %p51
      %p237 = pneg %p48
      %p238 = scmp.lt.s32.totalorder %s20, 1
      %s239 = scalar_select %p238, %s20, 1
      %p240 = scmp.lt.s32.totalorder %s21, 1
      %s241 = scalar_select %p240, %s21, 1
      %s242 = smul.addr %s241, 2
      %s243 = smul.addr %s239, 4
      %s244 = sadd.s32 %s242, %s243
      %s245 = smul.addr %s244, 4
      %s246 = scalar_lea.vmem %s1, %s245
      %p247 = pneg %p79
      %p248 = pneg %p76
      %p249 = pneg %p100
      %p250 = pneg %p97
      %p251 = pneg %p121
      %p252 = pneg %p118
      %p253 = pneg %p142
      %p254 = pneg %p139
      %p255 = pneg %p170
      %p256 = pneg %p167
      %p257 = scmp.lt.s32.totalorder %s20, 1
      %s258 = scalar_select %p257, %s20, 1
      %p259 = scmp.lt.s32.totalorder %s21, 1
      %s260 = scalar_select %p259, %s21, 1
      %s261 = smul.addr %s258, 2
      %s262 = sadd.s32 %s260, %s261
      %s263 = smul.addr %s262, 8
      %s264 = scalar_lea.vmem %s5, %s263
      %p265 = scmp.lt.s32.totalorder %s20, 1
      %s266 = scalar_select %p265, %s20, 1
      %p267 = scmp.lt.s32.totalorder %s21, 1
      %s268 = scalar_select %p267, %s21, 1
      %s269 = smul.addr %s266, 2
      %s270 = sadd.s32 %s268, %s269
      %s271 = smul.addr %s270, 4
      %s272 = scalar_lea.vmem %s0, %s271
      %p273 = scmp.lt.s32.totalorder %s20, 1
      %s274 = scalar_select %p273, %s20, 1
      %p275 = scmp.lt.s32.totalorder %s21, 1
      %s276 = scalar_select %p275, %s21, 1
      %s277 = smul.addr %s276, 2
      %s278 = smul.addr %s274, 4
      %s279 = sadd.s32 %s277, %s278
      %s280 = smul.addr %s279, 4
      %s281 = scalar_lea.vmem %s1, %s280
      %p282 = scmp.lt.s32.totalorder %s20, 1
      %s283 = scalar_select %p282, %s20, 1
      %p284 = scmp.lt.s32.totalorder %s21, 1
      %s285 = scalar_select %p284, %s21, 1
      %s286 = smul.addr %s283, 2
      %s287 = sadd.s32 %s285, %s286
      %s288 = smul.addr %s287, 8
      %s289 = scalar_lea.vmem %s5, %s288
      %vm290 = vcmask 3072
      %291 = vst.msk [vmem:[#allocation2] sm:$0xf] %vm290, 0.0
      %v292 = vld [vmem:[%s281] sm:$0xf]
      %294 = vrot.lane.b32.xlu0 %v292, 1
      %v295 = vpop.permute.xlu0 %294
      %vm297 = vcmask 134152
      %298 = vst.msk [vmem:[#allocation2] sm:$0xf] %vm297, %v295
      %v299 = vld [vmem:[%s272] sm:$0xf]
      %301 = vrot.lane.b32.xlu0 %v299, 17
      %v302 = vpop.permute.xlu0 %301
      %v303 = vrot.slane %v302, 4
      %vm304 = vcmask 138240
      %v305 = vsel %vm304, %v303, %v302
      %vm307 = vcmask 1043592
      %vm308 = vcmask 138244
      %vm309 = vmor %vm308, %vm307
      %310 = vst.msk [vmem:[#allocation2] sm:$0xff] %vm309, %v305
      %s311 = scalar_lea.vmem %s281, 4
      %v312 = vld [vmem:[%s311] sm:$0xf]
      %314 = vrot.lane.b32.xlu0 %v312, 17
      %v315 = vpop.permute.xlu0 %314
      %vm317 = vcmask 265352
      %318 = vst.msk [vmem:[#allocation2 + $0x4] sm:$0xf] %vm317, %v315
      %vm319 = vcmask 273672
      %320 = vst.msk [vmem:[#allocation2 + $0x4] sm:$0xf] %vm319, 0.0
      %v321 = vld [vmem:[%s4] sm:$0x1]
      %v322 = vld [vmem:[%s4 + $0x1] sm:$0x1]
      %v323 = vld [vmem:[#allocation2] sm:$0xf]
      %v324 = vlaneseq
      %v325 = vshrl.u32 %v324, 7
      %v326 = vsub.s32 0, %v325
      %v327 = vrot.slane %v321, %v326
      %v328 = vmul.f32 %v323, %v327
      %329 = vst [vmem:[#allocation3] sm:$0xf] %v328
      %v330 = vld [vmem:[#allocation2] sm:$0xff]
      %v332 = vcombine.high %v330, %v330
      %333 = vrot.lane.b32.xlu0 %v330, 127
      %v334 = vpop.permute.xlu0 %333
      %335 = vrot.lane.b32.xlu0 %v332, 127
      %v336 = vpop.permute.xlu0 %335
      %vm337 = vcmask 1039360
      %v338 = vsel %vm337, %v334, %v336
      %340 = vst [vmem:[#allocation3 + $0x4] sm:$0xf] %v338
      %v341 = vld [vmem:[#allocation2] sm:$0xff]
      %v342 = vlaneseq
      %v343 = vshrl.u32 %v342, 7
      %v344 = vsub.s32 0, %v343
      %v345 = vrot.slane %v322, %v344
      %347 = vrot.lane.b32.xlu0 %v345, 2
      %v348 = vpop.permute.xlu0 %347
      %v349 = vrot.slane %v348, 4
      %vm350 = vcmask 15360
      %v351 = vsel %vm350, %v349, %v348
      %v353 = vmul.f32 %v341, %v351
      %v355 = vcombine.high %v353, %v353
      %356 = vrot.lane.b32.xlu0 %v353, 126
      %v357 = vpop.permute.xlu0 %356
      %358 = vrot.lane.b32.xlu0 %v355, 126
      %v359 = vpop.permute.xlu0 %358
      %vm360 = vcmask 1031168
      %v361 = vsel %vm360, %v357, %v359
      %363 = vst [vmem:[#allocation3 + $0x8] sm:$0xf] %v361
      %v364 = vld [vmem:[#allocation2] sm:$0xff]
      %366 = vrot.lane.b32.xlu0 %v327, 16
      %v367 = vpop.permute.xlu0 %366
      %v368 = vrot.slane %v367, 4
      %vm369 = vcmask 130048
      %v370 = vsel %vm369, %v368, %v367
      %v372 = vmul.f32 %v364, %v370
      %v374 = vcombine.high %v372, %v372
      %375 = vrot.lane.b32.xlu0 %v372, 112
      %v376 = vpop.permute.xlu0 %375
      %377 = vrot.lane.b32.xlu0 %v374, 112
      %v378 = vpop.permute.xlu0 %377
      %vm379 = vcmask 916480
      %v380 = vsel %vm379, %v376, %v378
      %382 = vst [vmem:[#allocation3 + $0xc] sm:$0xf] %v380
      %v383 = vld [vmem:[#allocation2] sm:$0xff]
      %v385 = vcombine.high %v383, %v383
      %386 = vrot.lane.b32.xlu0 %v383, 111
      %v387 = vpop.permute.xlu0 %386
      %388 = vrot.lane.b32.xlu0 %v385, 111
      %v389 = vpop.permute.xlu0 %388
      %vm390 = vcmask 908288
      %v391 = vsel %vm390, %v387, %v389
      %393 = vst [vmem:[#allocation3 + $0x10] sm:$0xf] %v391
      %v394 = vld [vmem:[#allocation2] sm:$0xff]
      %395 = vrot.lane.b32.xlu0 %v345, 18
      %v396 = vpop.permute.xlu0 %395
      %v397 = vrot.slane %v396, 4
      %vm398 = vcmask 146432
      %v399 = vsel %vm398, %v397, %v396
      %v401 = vmul.f32 %v394, %v399
      %v403 = vcombine.high %v401, %v401
      %404 = vrot.lane.b32.xlu0 %v401, 110
      %v405 = vpop.permute.xlu0 %404
      %406 = vrot.lane.b32.xlu0 %v403, 110
      %v407 = vpop.permute.xlu0 %406
      %vm408 = vcmask 900096
      %v409 = vsel %vm408, %v405, %v407
      %411 = vst [vmem:[#allocation3 + $0x14] sm:$0xf] %v409
      %v412 = vld [vmem:[#allocation2] sm:$0xff]
      %413 = vrot.lane.b32.xlu0 %v327, 32
      %v414 = vpop.permute.xlu0 %413
      %v415 = vrot.slane %v414, 4
      %vm416 = vcmask 261120
      %v417 = vsel %vm416, %v415, %v414
      %v419 = vmul.f32 %v412, %v417
      %v421 = vcombine.high %v419, %v419
      %422 = vrot.lane.b32.xlu0 %v419, 96
      %v423 = vpop.permute.xlu0 %422
      %424 = vrot.lane.b32.xlu0 %v421, 96
      %v425 = vpop.permute.xlu0 %424
      %vm426 = vcmask 785408
      %v427 = vsel %vm426, %v423, %v425
      %429 = vst [vmem:[#allocation3 + $0x18] sm:$0xf] %v427
      %v430 = vld [vmem:[#allocation2] sm:$0xff]
      %v432 = vcombine.high %v430, %v430
      %433 = vrot.lane.b32.xlu0 %v430, 95
      %v434 = vpop.permute.xlu0 %433
      %435 = vrot.lane.b32.xlu0 %v432, 95
      %v436 = vpop.permute.xlu0 %435
      %vm437 = vcmask 777216
      %v438 = vsel %vm437, %v434, %v436
      %440 = vst [vmem:[#allocation3 + $0x1c] sm:$0xf] %v438
      %v441 = vld [vmem:[#allocation2] sm:$0xff]
      %442 = vrot.lane.b32.xlu0 %v345, 34
      %v443 = vpop.permute.xlu0 %442
      %v444 = vrot.slane %v443, 4
      %vm445 = vcmask 277504
      %v446 = vsel %vm445, %v444, %v443
      %v448 = vmul.f32 %v441, %v446
      %v450 = vcombine.high %v448, %v448
      %451 = vrot.lane.b32.xlu0 %v448, 94
      %v452 = vpop.permute.xlu0 %451
      %453 = vrot.lane.b32.xlu0 %v450, 94
      %v454 = vpop.permute.xlu0 %453
      %vm455 = vcmask 769024
      %v456 = vsel %vm455, %v452, %v454
      %458 = vst [vmem:[#allocation3 + $0x20] sm:$0xf] %v456
      %v459 = vld [vmem:[%s2] sm:$0xff]
      %v460 = vld [vmem:[#allocation3] sm:$0xff]
      %v461 = vld [vmem:[#allocation3 + $0x8] sm:$0xff]
      %v462 = vld [vmem:[#allocation3 + $0x10] sm:$0xff]
      %v463 = vld [vmem:[#allocation3 + $0x18] sm:$0xff]
      %v464 = vld [vmem:[#allocation3 + $0x20] sm:$0xf]
      %v465 = vld [vmem:[%s3] sm:$0xff]
      %467 = vset.pattern.permute.xlu0 0
      %468 = vperm.xlu0 %467, %v465
      %v469 = vpop.permute.xlu0 %468
      %vm471 = vcmask 293888
      %v473 = vsel %vm471, %v459, 0
      %vm475 = vcmask 1043456
      %v477 = vsel %vm475, %v464, 0
      %479 = vmatprep.subr.mxu0 0.0
      %480 = vmatpush1.msra.mxu0 %v460
      %481 = vmatprep.subr.mxu0 0.0
      %482 = vmatpush1.msra.mxu0 %v461
      %483 = vmatprep.subr.mxu0 0.0
      %484 = vmatpush1.msra.mxu0 %v462
      %485 = vmatprep.subr.mxu0 0.0
      %486 = vmatpush1.msra.mxu0 %v463
      %487 = vmatprep.subr.mxu0 0.0
      %488 = vmatpush1.msra.mxu0 %v477
      %489 = vmatprep.subr.mxu0 0.0
      %490 = vmatpush1.msra.mxu0 0.0
      %491 = vmatprep.subr.mxu0 0.0
      %492 = vmatpush1.msra.mxu0 0.0
      %493 = vmatprep.subr.mxu0 0.0
      %494 = vmatpush1.msra.mxu0 0.0
      %495 = vmatprep.subr.mxu0 0.0
      %496 = vmatpush1.msra.mxu0 0.0
      %497 = vmatprep.subr.mxu0 0.0
      %498 = vmatpush1.msra.mxu0 0.0
      %499 = vmatprep.subr.mxu0 0.0
      %500 = vmatpush1.msra.mxu0 0.0
      %501 = vmatprep.subr.mxu0 0.0
      %502 = vmatpush1.msra.mxu0 0.0
      %503 = vmatprep.subr.mxu0 0.0
      %504 = vmatpush1.msra.mxu0 0.0
      %505 = vmatprep.subr.mxu0 0.0
      %506 = vmatpush1.msra.mxu0 0.0
      %507 = vmatprep.subr.mxu0 0.0
      %508 = vmatpush1.msra.mxu0 0.0
      %509 = vmatprep.subr.mxu0 0.0
      %510 = vmatpush1.msra.mxu0 0.0
      %511 = vmatprep.subr.mxu0 0.0
      %512 = vmatpush1.msra.mxu0 0.0
      %513 = vmatprep.subr.mxu0 0.0
      %514 = vmatpush1.msra.mxu0 0.0
      %515 = vmatprep.subr.mxu0 0.0
      %516 = vmatpush1.msra.mxu0 0.0
      %517 = vmatprep.subr.mxu0 0.0
      %518 = vmatpush1.msra.mxu0 0.0
      %519 = vmatprep.subr.mxu0 0.0
      %520 = vmatpush1.msra.mxu0 0.0
      %521 = vmatprep.subr.mxu0 0.0
      %522 = vmatpush1.msra.mxu0 0.0
      %523 = vmatprep.subr.mxu0 0.0
      %524 = vmatpush1.msra.mxu0 0.0
      %525 = vmatprep.subr.mxu0 0.0
      %526 = vmatpush1.msra.mxu0 0.0
      %527 = vmatprep.subr.mxu0 0.0
      %528 = vmatpush1.msra.mxu0 0.0
      %529 = vmatprep.subr.mxu0 0.0
      %530 = vmatpush1.msra.mxu0 0.0
      %531 = vmatprep.subr.mxu0 0.0
      %532 = vmatpush1.msra.mxu0 0.0
      %533 = vmatprep.subr.mxu0 0.0
      %534 = vmatpush1.msra.mxu0 0.0
      %535 = vmatprep.subr.mxu0 0.0
      %536 = vmatpush1.msra.mxu0 0.0
      %537 = vmatprep.subr.mxu0 0.0
      %538 = vmatpush1.msra.mxu0 0.0
      %539 = vmatprep.subr.mxu0 0.0
      %540 = vmatpush1.msra.mxu0 0.0
      %541 = vmatprep.subr.mxu0 0.0
      %542 = vmatpush1.msra.mxu0 0.0
      %543 = vmatprep.mubr.f32.mxu0 0.0
      %544 = vmatmul.mubr.f32.gmra.mrb[0].mxu0 %v473
      %v545 = vpop.f32.mrb[0].mxu0
      %v546 = vadd.f32 %v469, %v545
      %v547 = vpop.f32.mrb[0].mxu0
      %548 = vdwg.mxu0
      %v549 = vmax.f32 %v546, 0.0
      %550 = vst [vmem:[%s289] sm:$0xff] %v549
      %p551 = scmp.lt.s32.totalorder %s20, 1
      %s552 = scalar_select %p551, %s20, 1
      %p553 = scmp.lt.s32.totalorder %s21, 1
      %s554 = scalar_select %p553, %s21, 1
      %s555 = smul.addr %s552, 2
      %s556 = sadd.s32 %s554, %s555
      %s557 = smul.addr %s556, 8
      %s558 = scalar_lea.vmem %s5, %s557
      // Predicated region
      $region41: #{module_wrapper_feature_extraction.1} parent=39 // pred_check
        %p559 = pneg %p167
      $region42: #{module_wrapper_feature_extraction.1} parent=39 // pred_check_branch
        %561 = sbr.rel (%p559) target = $region44
      $region43: #{module_wrapper_feature_extraction.1} parent=39 // pred_region
        _
      $region44: #{module_wrapper_feature_extraction.1} parent=39 // pred_fallthru
        _
    $region40: #{module_wrapper_feature_extraction.1} parent=5 // pred_fallthru
      _
    %p562 = scmp.le.s32.totalorder 2, %s11
    // Predicated region
    $region45: #{module_wrapper_feature_extraction.1} parent=5 // pred_check
      %p563 = pneg %p562
    $region46: #{module_wrapper_feature_extraction.1} parent=5 // pred_check_branch
      %565 = sbr.rel (%p563) target = $region48
    $region47: #{module_wrapper_feature_extraction.1} parent=5 // pred_region
      %s566 = ssub.s32 %s11, 2
      // Predicated region
      $region49: #{module_wrapper_feature_extraction.1} parent=47 // pred_check
        %p567 = pneg %p173
      $region50: #{module_wrapper_feature_extraction.1} parent=47 // pred_check_branch
        %569 = sbr.rel (%p567) target = $region52
      $region51: #{module_wrapper_feature_extraction.1} parent=47 // pred_region
        %p570 = scmp.lt.s32.totalorder %s22, 1
        %s571 = scalar_select %p570, %s22, 1
        %p572 = scmp.lt.s32.totalorder %s23, 1
        %s573 = scalar_select %p572, %s23, 1
        %s574 = smul.addr %s571, 2
        %s575 = sadd.s32 %s573, %s574
        %s576 = smul.addr %s575, 8
        %s577 = scalar_lea.vmem %s5, %s576
      $region52: #{module_wrapper_feature_extraction.1} parent=47 // pred_fallthru
        _
    $region48: #{module_wrapper_feature_extraction.1} parent=5 // pred_fallthru
      _
  $region6: #{module_wrapper_feature_extraction.1} parent=0 // loop_footer
    %s15 = sadd.s32 1, %s11
  $region7: #{module_wrapper_feature_extraction.1} parent=0 // loop_footer_branch
    %10 = sbr.rel target = $region3
  $region8: #{module_wrapper_feature_extraction.1} parent=0 // loop_exit
    _

</llo_original>
